<compile_context>
chip_gen: v7x
topology: tpu7x:2x2x1
jax: 0.10.0
libtpu: 0.0.40
codegen_flags: <defaults>
</compile_context>

<pallas_src>
import math
from functools import partial

import numpy as np
import jax
import jax.numpy as jnp
from jax import lax
from jax.experimental import pallas as pl
from jax.experimental.pallas import tpu as pltpu


def _round_up(x, m):
    return ((x + m - 1) // m) * m


# ----------------------------- Pallas kernels ------------------------------

def _dm_scale_shift_kernel(dm_ref, out_ref):
    """Per-tile partial sums for compute_scale_and_shift on the masked depth.

    dm_ref rows: 0 = predicted depth, 1 = target depth / 25.
    out rows:    0=a00, 1=a01, 2=a11, 3=b0, 4=b1 (lane-broadcast), rest 0.
    """
    x = dm_ref[...]
    p = x[0:1, :]
    d2 = x[1:2, :]
    mm = jnp.where(d2 > 0.0, 1.0, 0.0)
    pm = p * mm
    zero = jnp.float32(0.0)
    vals = (jnp.sum(pm * p), jnp.sum(pm), jnp.sum(mm),
            jnp.sum(pm * d2), jnp.sum(d2 * mm), zero, zero, zero)
    out_ref[...] = jnp.concatenate(
        [jnp.full((1, 128), v, jnp.float32) for v in vals], axis=0)


def _make_fused_kernel(off, out_off, *, embed_msk, normal_mono, semantic,
                       depth_mono, need_red, lam_nm, lam_sky, lam_dm,
                       inv_scale, sky_label, ignore_index):
    """Single pass over the channel-major ray slab.

    Inputs  (per ray tile): [coef (1,128) if depth_mono], slab (n_rows,TILE_R),
                            [labels (TILE_R,1), logits (TILE_R,C) if semantic]
    Outputs (per ray tile): out (n_out,TILE_R) per-ray losses,
                            [red (8,128) partial sums if need_red]
      red rows: 0 = sum(mask^2), 1 = sum(nll*valid), 2 = sum(valid).
    """

    def body(coef_ref, slab_ref, labels_ref, logits_ref, out_ref, red_ref):
        x = slab_ref[...]

        def get(name):
            o, c = off[name]
            return x[o:o + c, :]

        def put(name, v):
            o, c = out_off[name]
            out_ref[o:o + c, :] = v            # direct row-slice store, no concat temp

        mask = get('mask') if embed_msk else None

        diff = get('rgb_p') - get('rgb_g')
        rgb_loss = diff * diff
        if embed_msk:
            rgb_loss = (1.0 - mask) * rgb_loss
        put('rgb', rgb_loss)

        if normal_mono or semantic or depth_mono:
            depth = get('depth')
        if normal_mono or depth_mono:
            w_scaled = jnp.exp(-depth * inv_scale)     # shared EUP transcendental
        if normal_mono:
            dn = get('n_g') - get('n_p')
            put('normal_mono', lam_nm * w_scaled * dn * dn)
        if semantic:
            # float compare is exact for integer labels < 2^24
            sky = jnp.where(get('label') == float(sky_label), 1.0, 0.0)
            if (normal_mono or depth_mono) and inv_scale == 1.0:
                e_depth = w_scaled
            else:
                e_depth = jnp.exp(-depth)
            put('sky', lam_sky * sky * e_depth)
        if depth_mono:
            d2 = get('d2')
            wd = jnp.where(d2 > 0.0, 1.0, 0.0)
            cf = coef_ref[...]                          # lanes 0/1 = scale/shift
            r = cf[:, 0:1] * depth + cf[:, 1:2] - d2
            put('dm', lam_dm * wd * w_scaled * r * r)

        if need_red:
            s_mask = jnp.float32(0.0)
            s_nll = jnp.float32(0.0)
            s_cnt = jnp.float32(0.0)
            if embed_msk:
                s_mask = jnp.sum(mask * mask)
            if semantic:
                logits = logits_ref[...]                # (TILE_R, C), un-padded classes
                labels = labels_ref[...]                # (TILE_R, 1) int32
                mx = jnp.max(logits, axis=-1, keepdims=True)
                z = logits - mx
                lse = jnp.log(jnp.sum(jnp.exp(z), axis=-1, keepdims=True))
                cls = lax.broadcasted_iota(jnp.int32, logits.shape, 1)
                onehot = jnp.where(cls == labels, 1.0, 0.0)
                nll = -jnp.sum(onehot * (z - lse), axis=-1, keepdims=True)
                valid = jnp.where(labels != ignore_index, 1.0, 0.0)
                s_nll = jnp.sum(nll * valid)
                s_cnt = jnp.sum(valid)
            zero = jnp.float32(0.0)
            red_ref[...] = jnp.concatenate(
                [jnp.full((1, 128), v, jnp.float32)
                 for v in (s_mask, s_nll, s_cnt, zero, zero, zero, zero, zero)],
                axis=0)

    def kernel(*refs):
        i = 0
        coef = None
        labels = None
        logits = None
        if depth_mono:
            coef = refs[i]; i += 1
        slab = refs[i]; i += 1
        if semantic:
            labels = refs[i]; logits = refs[i + 1]; i += 2
        out = refs[i]; i += 1
        red = refs[i] if need_red else None
        body(coef, slab, labels, logits, out, red)

    return kernel


def _distortion_kernel(tri_ref, ws_ref, de_ref, ts_ref, ns_ref, out_ref, *, lam):
    # Mip-NeRF360 distortion loss per ray (forward of vren.distortion_loss_fw).
    # tri_ref is the resident strictly-lower-triangular (S, S) prefix-sum
    # matrix in bf16; both exclusive prefix sums share one bf16 MXU matmul
    # with f32 accumulation.
    ws = ws_ref[...]
    de = de_ref[...]
    ts = ts_ref[...]
    ns = ns_ref[...]                                    # (TILE, 1) int32
    T, S = ws.shape
    samp = lax.broadcasted_iota(jnp.int32, (T, S), 1)
    valid = jnp.where(samp < ns, 1.0, 0.0)
    w = ws * valid
    wt = w * ts
    stacked = jnp.concatenate([w, wt], axis=0).astype(jnp.bfloat16)    # (2T, S)
    exc = jnp.dot(stacked, tri_ref[...], preferred_element_type=jnp.float32)
    w_exc = exc[:T, :]
    wt_exc = exc[T:, :]
    loss_bi = 2.0 * w * (ts * w_exc - wt_exc)
    loss_uni = (1.0 / 3.0) * w * w * de
    # NOTE: the (TILE, 1) column output is < 1/S_pad of this kernel's HBM
    # traffic, so a lane-dense relayout (or wrapper-side transpose) would cost
    # more than the masked stores it removes; left as-is deliberately.
    out_ref[...] = lam * jnp.sum(loss_bi + loss_uni, axis=-1, keepdims=True)


# --------------------------------- module ----------------------------------

class NeRFLoss:
    def __init__(self):
        self.lambda_opa = 0.0002            # unused in forward (matches torch)
        self.lambda_distortion = 0.001
        self.lambda_depth_mono = 1.0
        self.lambda_normal_mono = 0.0001
        self.lambda_sky = 0.1
        self.lambda_semantic = 0.01
        self.lambda_normal_rp = 0.001
        self.ann_max, self.ann_min, self.ann_k = 1.0, 0.06, 0.001
        self.ignore_index = 256

    def annealing_weight(self, t):
        return max(self.ann_min, self.ann_max * math.exp(-t * self.ann_k))

    # ------------- distortion loss (vren.distortion_loss_fw, forward) -------------
    def _distortion_loss(self, ws, deltas, ts, rays_a, s_max, uniform=None):
        ws = jnp.asarray(ws, jnp.float32)
        deltas = jnp.asarray(deltas, jnp.float32)
        ts = jnp.asarray(ts, jnp.float32)
        rays_a = jnp.asarray(rays_a)
        R = int(rays_a.shape[0])
        N = int(ws.shape[0])
        starts = rays_a[:, 1].astype(jnp.int32)
        ns = rays_a[:, 2].astype(jnp.int32)

        # Caller can assert uniform packing statically via `uniform_samples`
        # (preferred: no host sync, works under jit).  Otherwise probe only
        # when rays_a is a concrete array.
        if uniform is None:
            uniform = False
            if N == R * s_max:
                try:
                    ra = np.asarray(rays_a)            # raises under jit tracing
                    uniform = bool((ra[:, 2] == s_max).all()
                                   and (ra[:, 1] == np.arange(R) * s_max).all())
                except Exception:
                    uniform = False

        if uniform:
            ws_p = ws.reshape(R, s_max)
            de_p = deltas.reshape(R, s_max)
            ts_p = ts.reshape(R, s_max)
        else:
            # TODO(synk): replace this XLA gather with a scalar-prefetch / manual
            # DMA kernel streaming each ray's contiguous [start, start+n) sample
            # range from HBM (rays with more than s_max samples truncate here).
            idx = jnp.clip(starts[:, None] + jnp.arange(s_max)[None, :], 0, N - 1)
            ws_p = jnp.take(ws, idx, axis=0)
            de_p = jnp.take(deltas, idx, axis=0)
            ts_p = jnp.take(ts, idx, axis=0)

        S_pad = _round_up(max(s_max, 1), 128)           # MXU / lane granularity
        # Ray tile derived from S_pad: large tiles when the sample axis is short
        # (amortize grid/step overhead), small tiles when it is long so the
        # kernel fits v7x's 64 MiB VMEM.
        if S_pad <= 256:
            tile = 1024
        elif S_pad <= 512:
            tile = 512
        elif S_pad <= 1024:
            tile = 256
        else:
            tile = 128
        TILE = min(tile, _round_up(R, 8))
        R_pad = _round_up(R, TILE)

        def pad2(a):
            return jnp.pad(a, ((0, R_pad - R), (0, S_pad - s_max)))

        ws_p, de_p, ts_p = pad2(ws_p), pad2(de_p), pad2(ts_p)
        ns_col = jnp.pad(ns, (0, R_pad - R)).reshape(R_pad, 1)
        tri = (jnp.arange(S_pad)[:, None] < jnp.arange(S_pad)[None, :]
               ).astype(jnp.bfloat16)                   # 0/1: exact in bf16

        # VMEM budget: double-buffered input tiles + resident bf16 tri + temps.
        est = (2 * 3 * TILE * S_pad * 4) + (2 * S_pad * S_pad * 2) \
            + (2 * TILE * 4) + (2 * TILE * 4)
        vmem_limit = int(min(56 * 2**20, max(32 * 2**20, 3 * est)))

        out = pl.pallas_call(
            partial(_distortion_kernel, lam=self.lambda_distortion),
            out_shape=jax.ShapeDtypeStruct((R_pad, 1), jnp.float32),
            grid=(R_pad // TILE,),
            in_specs=[
                pl.BlockSpec((S_pad, S_pad), lambda i: (0, 0)),   # resident mask
                pl.BlockSpec((TILE, S_pad), lambda i: (i, 0)),
                pl.BlockSpec((TILE, S_pad), lambda i: (i, 0)),
                pl.BlockSpec((TILE, S_pad), lambda i: (i, 0)),
                pl.BlockSpec((TILE, 1), lambda i: (i, 0)),
            ],
            out_specs=pl.BlockSpec((TILE, 1), lambda i: (i, 0)),
            compiler_params=pltpu.CompilerParams(
                dimension_semantics=("parallel",),
                vmem_limit_bytes=vmem_limit),
        )(tri, ws_p, de_p, ts_p, ns_col)
        return out[:R, 0]                               # (N_rays,), lambda folded in

    # ----------------------------------- forward -----------------------------------
    def __call__(self, results, target, **kwargs):
        d = {}
        embed_msk = bool(kwargs.get('embed_msk', False))
        stylize = bool(kwargs.get('stylize', False))
        normal_p = (not stylize) and bool(kwargs.get('normal_p', False))
        normal_mono = (not stylize) and bool(kwargs.get('normal_mono', False))
        semantic = (not stylize) and bool(kwargs.get('semantic', False))
        depth_mono = (not stylize) and bool(kwargs.get('depth_mono', False))
        scale = float(kwargs.get('scale', 1))
        inv_scale = 1.0 / scale
        sky_label = int(kwargs.get('sky_label', 4))

        rgb_p = jnp.asarray(results['rgb'], jnp.float32)
        rgb_shape = rgb_p.shape
        R = int(rgb_p.shape[0])
        rgb2 = rgb_p.reshape(R, -1)
        crgb = int(rgb2.shape[1])
        rgb_g2 = jnp.asarray(target['rgb'], jnp.float32).reshape(R, -1)

        # Lane-dense ray tiling (rays on the 128-lane axis).  Keep >= 2 grid
        # steps whenever possible so "parallel" semantics can feed both v7x TCs.
        R128 = _round_up(max(R, 1), 128)
        if R128 >= 256:
            TILE_R = min(2048, _round_up(R128 // 2, 128))
        else:
            TILE_R = R128
        R_pad = _round_up(R, TILE_R)
        n_tiles = R_pad // TILE_R

        # ------------- build the channel-major [n_rows, R_pad] input slab -------------
        rows, off = [], {}

        def _add(name, arr, c):
            off[name] = (int(sum(r.shape[0] for r in rows)), c)
            rows.append(jnp.asarray(arr, jnp.float32).reshape(R, c).T)   # (c, R)

        _add('rgb_p', rgb2, crgb)
        _add('rgb_g', rgb_g2, crgb)

        mask_size = None
        if embed_msk:
            mask2 = jnp.asarray(kwargs['mask'], jnp.float32).reshape(R, -1)
            mask_size = int(mask2.size)
            _add('mask', mask2, int(mask2.shape[1]))

        need_depth = normal_mono or semantic or depth_mono
        if need_depth:
            _add('depth', results['depth'], 1)
        if depth_mono:          # keep d2 adjacent to depth (pre-pass slices 2 rows)
            _add('d2', jnp.asarray(target['depth'], jnp.float32) / 25.0, 1)
        labels = None
        if semantic:
            labels = jnp.asarray(target['label']).astype(jnp.int32).reshape(R)
            _add('label', labels.astype(jnp.float32), 1)
        if normal_mono:
            _add('n_g', target['normal'], 3)
            _add('n_p', results['normal_pred'], 3)

        # single concat + single pad -> one wrapper HBM pass over the slab
        slab = jnp.pad(jnp.concatenate(rows, axis=0), ((0, 0), (0, R_pad - R)))
        n_rows = int(slab.shape[0])

        # ---------------- output row layout of the fused kernel ----------------
        out_off, n_out = {}, 0
        for name, c, enabled in (('rgb', crgb, True),
                                 ('normal_mono', 3, normal_mono),
                                 ('sky', 1, semantic),
                                 ('dm', 1, depth_mono)):
            if enabled:
                out_off[name] = (n_out, c)
                n_out += c

        # ------- depth_mono pre-pass: scale/shift normal-equation sums (2 rows) -------
        coef_arr = None
        if depth_mono:
            o_d = off['depth'][0]
            dm_slab = slab[o_d:o_d + 2, :]              # only the rows it reads
            pre = pl.pallas_call(
                _dm_scale_shift_kernel,
                out_shape=jax.ShapeDtypeStruct((8, n_tiles * 128), jnp.float32),
                grid=(n_tiles,),
                in_specs=[pl.BlockSpec((2, TILE_R), lambda i: (0, i))],
                out_specs=pl.BlockSpec((8, 128), lambda i: (0, i)),
                compiler_params=pltpu.CompilerParams(
                    dimension_semantics=("parallel",)),
            )(dm_slab)
            s = pre.reshape(8, n_tiles, 128)[:, :, 0].sum(axis=1)
            a00, a01, a11, b0, b1 = s[0], s[1], s[2], s[3], s[4]
            det = a00 * a11 - a01 * a01
            # torch branches on det != 0 with a degenerate tensor fallback;
            # we guard the division with where (det is nonzero in practice).
            safe = jnp.where(det != 0, det, 1.0)
            x0 = jnp.where(det != 0, (a11 * b0 - a01 * b1) / safe, 0.0)
            x1 = jnp.where(det != 0, (-a01 * b0 + a00 * b1) / safe, 0.0)
            coef_arr = jnp.zeros((1, 128), jnp.float32).at[0, 0].set(x0).at[0, 1].set(x1)

        # -------- single fused pass: per-ray losses + scalar-loss partial sums --------
        need_red = embed_msk or semantic

        in_arrays, in_specs = [], []
        if depth_mono:
            in_arrays.append(coef_arr)
            in_specs.append(pl.BlockSpec((1, 128), lambda i: (0, 0)))
        in_arrays.append(slab)
        in_specs.append(pl.BlockSpec((n_rows, TILE_R), lambda i: (0, i)))
        if semantic:
            logits = jnp.asarray(results['semantic'], jnp.float32).reshape(R, -1)
            C = int(logits.shape[1])
            # no class-axis padding: a full-width last block dim is allowed
            logits_p = jnp.pad(logits, ((0, R_pad - R), (0, 0)))
            labels_col = jnp.pad(labels, (0, R_pad - R),
                                 constant_values=self.ignore_index).reshape(R_pad, 1)
            in_arrays += [labels_col, logits_p]
            in_specs += [pl.BlockSpec((TILE_R, 1), lambda i: (i, 0)),
                         pl.BlockSpec((TILE_R, C), lambda i: (i, 0))]

        out_shapes = [jax.ShapeDtypeStruct((n_out, R_pad), jnp.float32)]
        out_specs = [pl.BlockSpec((n_out, TILE_R), lambda i: (0, i))]
        if need_red:
            out_shapes.append(jax.ShapeDtypeStruct((8, n_tiles * 128), jnp.float32))
            out_specs.append(pl.BlockSpec((8, 128), lambda i: (0, i)))

        outs = pl.pallas_call(
            _make_fused_kernel(off, out_off, embed_msk=embed_msk,
                               normal_mono=normal_mono, semantic=semantic,
                               depth_mono=depth_mono, need_red=need_red,
                               lam_nm=self.lambda_normal_mono,
                               lam_sky=self.lambda_sky,
                               lam_dm=self.lambda_depth_mono,
                               inv_scale=inv_scale, sky_label=sky_label,
                               ignore_index=self.ignore_index),
            out_shape=out_shapes,
            grid=(n_tiles,),
            in_specs=in_specs,
            out_specs=out_specs,
            compiler_params=pltpu.CompilerParams(
                dimension_semantics=("parallel",)),
        )(*in_arrays)
        out_slab = outs[0]

        if need_red:
            red = outs[1].reshape(8, n_tiles, 128)[:, :, 0].sum(axis=1)
            if embed_msk:
                size_delta = self.annealing_weight(kwargs['step'])
                # digit_delta = 0 in the torch module -> only the size term matters.
                d['r_ms'] = (red[0] / mask_size) * size_delta
            if semantic:
                cnt = red[2]
                d['CELoss'] = self.lambda_semantic * jnp.where(
                    cnt > 0, red[1] / jnp.where(cnt > 0, cnt, 1.0), 0.0)

        def _take(name):
            o, c = out_off[name]
            return out_slab[o:o + c, :R].T              # (R, c)

        d['rgb'] = _take('rgb').reshape(rgb_shape)
        if normal_mono:
            d['normal_mono'] = _take('normal_mono').reshape(jnp.shape(target['normal']))
        if semantic:
            d['sky_depth'] = _take('sky').reshape(jnp.shape(results['depth']))
        if depth_mono:
            d['depth_mono'] = _take('dm').reshape(jnp.shape(results['depth']))

        if not stylize:
            if normal_p:
                # One constant vmul each — leave to XLA (a pallas_call here is overhead).
                d['Rp'] = self.lambda_normal_rp * jnp.asarray(results['Rp'], jnp.float32)
                d['Ro'] = (0.001 * self.lambda_normal_rp) * jnp.asarray(results['Ro'], jnp.float32)
            if self.lambda_distortion > 0:
                s_max = int(kwargs.get(
                    'max_samples',
                    results['ws'].shape[0] // results['rays_a'].shape[0]))
                d['distortion'] = self._distortion_loss(
                    results['ws'], results['deltas'], results['ts'],
                    results['rays_a'], s_max,
                    uniform=kwargs.get('uniform_samples', None))
        return d


# ---------------------------------- demo ------------------------------------

if __name__ == "__main__":
    key = jax.random.PRNGKey(0)
    R, S, C = 8, 16, 8          # rays, samples per ray, semantic classes
    N = R * S
    ks = jax.random.split(key, 12)

    rgb_pred = jax.random.uniform(ks[0], (R, 3), jnp.float32)
    rgb_gt = jax.random.uniform(ks[1], (R, 3), jnp.float32)
    depth = jax.random.uniform(ks[2], (R,), jnp.float32, 0.5, 5.0)
    normal_pred = jax.random.normal(ks[3], (R, 3), jnp.float32)
    normal_gt = jax.random.normal(ks[4], (R, 3), jnp.float32)
    logits = jax.random.normal(ks[5], (R, C), jnp.float32)
    labels = jax.random.randint(ks[6], (R,), 0, C).astype(jnp.int32)
    labels = labels.at[0].set(4).at[1].set(256)      # one sky pixel, one ignored
    depth_gt = jax.random.uniform(ks[7], (R,), jnp.float32, 1.0, 50.0)
    Rp = jax.random.normal(ks[8], (R, 1), jnp.float32)
    Ro = jax.random.uniform(ks[9], (R, 1), jnp.float32)
    mask = jax.random.uniform(ks[10], (R, 1), jnp.float32)

    ws = jax.random.uniform(ks[11], (N,), jnp.float32)
    t_row = jnp.linspace(0.05, 3.95, S, dtype=jnp.float32)
    ts_flat = jnp.tile(t_row, R)
    deltas_flat = jnp.full((N,), float(t_row[1] - t_row[0]), jnp.float32)
    rays_a = jnp.stack([jnp.arange(R), jnp.arange(R) * S,
                        jnp.full((R,), S)], axis=1).astype(jnp.int32)

    results = {'rgb': rgb_pred, 'depth': depth, 'normal_pred': normal_pred,
               'semantic': logits, 'ws': ws, 'deltas': deltas_flat,
               'ts': ts_flat, 'rays_a': rays_a, 'Rp': Rp, 'Ro': Ro}
    target = {'rgb': rgb_gt, 'normal': normal_gt, 'label': labels,
              'depth': depth_gt}

    loss_fn = NeRFLoss()
    d_full = loss_fn(results, target, normal_p=True, normal_mono=True,
                     semantic=True, depth_mono=True, sky_label=4, scale=1.0,
                     uniform_samples=True)
    d_msk = loss_fn(results, target, embed_msk=True, mask=mask, step=100)

    jax.block_until_ready(d_full)
    jax.block_until_ready(d_msk)
    print("KERNEL_OK")
</pallas_src>

<mosaic_0001>
module attributes {stable_mosaic.version = 11 : i64} {
  func.func @_dm_scale_shift_kernel(%arg0: i32, %arg1: memref<2x128xf32, #tpu.memory_space<vmem>>, %arg2: memref<8x128xf32, #tpu.memory_space<vmem>>) attributes {dimension_semantics = [#tpu.dimension_semantics<parallel>], iteration_bounds = array<i64: 1>, scalar_prefetch = 0 : i64, scratch_operands = 0 : i64, tpu.core_type = #tpu.core_type<tc>, window_params = [{transform_indices = @transform_0, window_bounds = array<i64: 2, 128>}, {transform_indices = @transform_1, window_bounds = array<i64: 8, 128>}]} {
    %c0 = arith.constant 0 : index
    %c0_0 = arith.constant 0 : index
    %0 = vector.load %arg1[%c0, %c0_0] : memref<2x128xf32, #tpu.memory_space<vmem>>, vector<2x128xf32>
    %1 = vector.extract_strided_slice %0 {offsets = [0, 0], sizes = [1, 128], strides = [1, 1]} : vector<2x128xf32> to vector<1x128xf32>
    %2 = vector.extract_strided_slice %0 {offsets = [1, 0], sizes = [1, 128], strides = [1, 1]} : vector<2x128xf32> to vector<1x128xf32>
    %cst = arith.constant 0.000000e+00 : f32
    %3 = vector.broadcast %cst : f32 to vector<1x128xf32>
    %4 = arith.cmpf ogt, %2, %3 : vector<1x128xf32>
    %cst_1 = arith.constant 1.000000e+00 : f32
    %cst_2 = arith.constant 0.000000e+00 : f32
    %5 = vector.broadcast %cst_1 : f32 to vector<1x128xf32>
    %6 = vector.broadcast %cst_2 : f32 to vector<1x128xf32>
    %7 = arith.select %4, %5, %6 : vector<1x128xi1>, vector<1x128xf32>
    %8 = arith.mulf %1, %7 : vector<1x128xf32>
    %9 = arith.mulf %8, %1 : vector<1x128xf32>
    %10 = vector.shape_cast %9 : vector<1x128xf32> to vector<1x1x128xf32>
    %cst_3 = arith.constant dense<0.000000e+00> : vector<1xf32>
    %11 = vector.multi_reduction <add>, %10, %cst_3 [1, 2] : vector<1x1x128xf32> to vector<1xf32>
    %12 = vector.shape_cast %11 : vector<1xf32> to vector<1x1x1xf32>
    %13 = vector.extract %12[0, 0, 0] : f32 from vector<1x1x1xf32>
    %14 = vector.shape_cast %8 : vector<1x128xf32> to vector<1x1x128xf32>
    %cst_4 = arith.constant dense<0.000000e+00> : vector<1xf32>
    %15 = vector.multi_reduction <add>, %14, %cst_4 [1, 2] : vector<1x1x128xf32> to vector<1xf32>
    %16 = vector.shape_cast %15 : vector<1xf32> to vector<1x1x1xf32>
    %17 = vector.extract %16[0, 0, 0] : f32 from vector<1x1x1xf32>
    %18 = vector.shape_cast %7 : vector<1x128xf32> to vector<1x1x128xf32>
    %cst_5 = arith.constant dense<0.000000e+00> : vector<1xf32>
    %19 = vector.multi_reduction <add>, %18, %cst_5 [1, 2] : vector<1x1x128xf32> to vector<1xf32>
    %20 = vector.shape_cast %19 : vector<1xf32> to vector<1x1x1xf32>
    %21 = vector.extract %20[0, 0, 0] : f32 from vector<1x1x1xf32>
    %22 = arith.mulf %8, %2 : vector<1x128xf32>
    %23 = vector.shape_cast %22 : vector<1x128xf32> to vector<1x1x128xf32>
    %cst_6 = arith.constant dense<0.000000e+00> : vector<1xf32>
    %24 = vector.multi_reduction <add>, %23, %cst_6 [1, 2] : vector<1x1x128xf32> to vector<1xf32>
    %25 = vector.shape_cast %24 : vector<1xf32> to vector<1x1x1xf32>
    %26 = vector.extract %25[0, 0, 0] : f32 from vector<1x1x1xf32>
    %27 = arith.mulf %2, %7 : vector<1x128xf32>
    %28 = vector.shape_cast %27 : vector<1x128xf32> to vector<1x1x128xf32>
    %cst_7 = arith.constant dense<0.000000e+00> : vector<1xf32>
    %29 = vector.multi_reduction <add>, %28, %cst_7 [1, 2] : vector<1x1x128xf32> to vector<1xf32>
    %30 = vector.shape_cast %29 : vector<1xf32> to vector<1x1x1xf32>
    %31 = vector.extract %30[0, 0, 0] : f32 from vector<1x1x1xf32>
    %32 = vector.broadcast %13 : f32 to vector<1x128xf32>
    %33 = vector.broadcast %17 : f32 to vector<1x128xf32>
    %34 = vector.broadcast %21 : f32 to vector<1x128xf32>
    %35 = vector.broadcast %26 : f32 to vector<1x128xf32>
    %36 = vector.broadcast %31 : f32 to vector<1x128xf32>
    %cst_8 = arith.constant 0.000000e+00 : f32
    %37 = vector.broadcast %cst_8 : f32 to vector<1x128xf32>
    %cst_9 = arith.constant 0.000000e+00 : f32
    %38 = vector.broadcast %cst_9 : f32 to vector<1x128xf32>
    %cst_10 = arith.constant 0.000000e+00 : f32
    %39 = vector.broadcast %cst_10 : f32 to vector<1x128xf32>
    %40 = tpu.concatenate %32, %33, %34, %35, %36, %37, %38, %39 in 0 : vector<1x128xf32>, vector<1x128xf32>, vector<1x128xf32>, vector<1x128xf32>, vector<1x128xf32>, vector<1x128xf32>, vector<1x128xf32>, vector<1x128xf32> -> vector<8x128xf32>
    %c0_11 = arith.constant 0 : index
    %c0_12 = arith.constant 0 : index
    %41 = vector.load %arg2[%c0_11, %c0_12] : memref<8x128xf32, #tpu.memory_space<vmem>>, vector<8x128xf32>
    tpu.vector_store %arg2[%c0_11, %c0_12], %40 {strides = array<i32>} : memref<8x128xf32, #tpu.memory_space<vmem>>, vector<8x128xf32>,
    return
  }
  func.func @transform_0(%arg0: i32) -> (i32, i32) {
    %c0_i32 = arith.constant 0 : i32
    %c0_i32_0 = arith.constant 0 : i32
    return %c0_i32, %arg0 : i32, i32
  }
  func.func @transform_1(%arg0: i32) -> (i32, i32) {
    %c0_i32 = arith.constant 0 : i32
    %c0_i32_0 = arith.constant 0 : i32
    return %c0_i32, %arg0 : i32, i32
  }
}

</mosaic_0001>

<llo_original>
// kernel: tpu_custom_call.1
$region0: #{tpu_custom_call.1}
  #allocation0 [shape = 'u32[]', space=smem, size = 0x4, offset = 0x4, fixed_abs, tag = 'smem constant byte address 0x4 - core index']
  #allocation1 [shape = 'u32[144,128]{1,0:T(1,128)}', space=vmem, size = 0x12000, scoped, tag = 'internal scratch']
  %s0 = inlined_call_operand.hbm [shape: f32[2,128], index: 0, kind: input, shape index: {}]
  %s1 = inlined_call_operand.hbm [shape: f32[8,128], index: 1, kind: output, shape index: {}]
  %s2 = sld [smem:[#allocation0]]
  $region18: #{tpu_custom_call.1} parent=0
    _
  %s4 = ssub.s32 1, %s2
  %s5 = scalar_select 0, %s4, %s2
  $region1: #{tpu_custom_call.1} parent=0
    #allocation2 [shape = 'u8[1024]{0}', space=vmem, size = 0x400, scoped, tag = 'input window, operand 0, single buffered']
    #allocation3 [shape = 's32[1]{0}', space=sflag, size = 0x4, scoped, tag = 'scoped memory for tpu_custom_call.1']
    #allocation4 [shape = 's32[1]{0}', space=sflag, size = 0x4, scoped, tag = 'scoped memory for tpu_custom_call.1']
    #allocation5 [shape = 'u8[4096]{0}', space=vmem, size = 0x1000, scoped, tag = 'output window, operand 0, single buffered']
    %6 = vsyncpa [#allocation3], 0
    %7 = vsyncpa [#allocation4], 0
    // Predicated region
    $region2: #{tpu_custom_call.1} parent=1 // pred_check
      _
    $region3: #{tpu_custom_call.1} parent=1 // pred_check_branch
      %9 = sbr.rel (0) target = $region5
    $region4: #{tpu_custom_call.1} parent=1 // pred_region
      %s11 = ssub.s32 32, 32
      %12 = vsyncadd [#allocation3], %s11
      %s14 = sshll.u32 [#allocation2], 4
      %s15 = int_to_ptr.vmem [resolvable:$true] %s14
      %17 = dma.hbm_to_vmem [thread:$0]  %s0, 32, %s15, [#allocation3]
    $region5: #{tpu_custom_call.1} parent=1 // pred_fallthru
      _
    // Predicated region
    $region6: #{tpu_custom_call.1} parent=1 // pred_check
      _
    $region7: #{tpu_custom_call.1} parent=1 // pred_check_branch
      %19 = sbr.rel (0) target = $region9
    $region8: #{tpu_custom_call.1} parent=1 // pred_region
      %20 = dma.done [#allocation3], 32
    $region9: #{tpu_custom_call.1} parent=1 // pred_fallthru
      _
    %v21 = vld [vmem:[#allocation2] sm:$0x3]
    %vm22 = vcmp.gt.f32.partialorder %v21, 0.0
    %v23 = vsel %vm22, 1.0, 0.0
    %v25 = vrot.slane %v23, 1
    %v27 = vmul.f32 %v21, %v25
    %v28 = vmul.f32 %v27, %v21
    %vm29 = vcmask 1040384
    %v30 = vsel %vm29, %v28, 0.0
    %31 = vadd.xlane.f32.xlu0 %v30
    %v32 = vpop.xlane.xlu0 %31
    %v33 = vrot.slane %v32, 4
    %v34 = vadd.f32 %v32, %v33
    %v35 = vrot.slane %v34, 2
    %v36 = vadd.f32 %v34, %v35
    %v37 = vrot.slane %v36, 1
    %v38 = vadd.f32 %v36, %v37
    %s39 = vtos %v38
    %v40 = vsel %vm29, %v27, 0.0
    %41 = vadd.xlane.f32.xlu0 %v40
    %v42 = vpop.xlane.xlu0 %41
    %v43 = vrot.slane %v42, 4
    %v44 = vadd.f32 %v42, %v43
    %v45 = vrot.slane %v44, 2
    %v46 = vadd.f32 %v44, %v45
    %v47 = vrot.slane %v46, 1
    %v48 = vadd.f32 %v46, %v47
    %s49 = vtos %v48
    %v50 = vsel %vm29, %v25, 0.0
    %51 = vadd.xlane.f32.xlu0 %v50
    %v52 = vpop.xlane.xlu0 %51
    %v53 = vrot.slane %v52, 4
    %v54 = vadd.f32 %v52, %v53
    %v55 = vrot.slane %v54, 2
    %v56 = vadd.f32 %v54, %v55
    %v57 = vrot.slane %v56, 1
    %v58 = vadd.f32 %v56, %v57
    %s59 = vtos %v58
    %v61 = vrot.slane %v21, 1
    %v63 = vmul.f32 %v27, %v61
    %v64 = vsel %vm29, %v63, 0.0
    %65 = vadd.xlane.f32.xlu0 %v64
    %v66 = vpop.xlane.xlu0 %65
    %v67 = vrot.slane %v66, 4
    %v68 = vadd.f32 %v66, %v67
    %v69 = vrot.slane %v68, 2
    %v70 = vadd.f32 %v68, %v69
    %v71 = vrot.slane %v70, 1
    %v72 = vadd.f32 %v70, %v71
    %s73 = vtos %v72
    %v74 = vmul.f32 %v21, %v23
    %v76 = vrot.slane %v74, 1
    %v78 = vsel %vm29, %v76, 0.0
    %79 = vadd.xlane.f32.xlu0 %v78
    %v80 = vpop.xlane.xlu0 %79
    %v81 = vrot.slane %v80, 4
    %v82 = vadd.f32 %v80, %v81
    %v83 = vrot.slane %v82, 2
    %v84 = vadd.f32 %v82, %v83
    %v85 = vrot.slane %v84, 1
    %v86 = vadd.f32 %v84, %v85
    %s87 = vtos %v86
    %v88 = vstv %s39
    %v89 = vstv %s49
    %v90 = vstv %s59
    %v91 = vstv %s73
    %v92 = vstv %s87
    %v93 = vsel %vm29, %v88, %v89
    %vm94 = vcmask 1041408
    %v95 = vsel %vm94, %v93, %v90
    %vm96 = vcmask 1042432
    %v97 = vsel %vm96, %v95, %v91
    %vm98 = vcmask 1043456
    %v99 = vsel %vm98, %v97, %v92
    %vm100 = vcmask 1044480
    %v101 = vsel %vm100, %v99, 0.0
    %vm102 = vcmask 1045504
    %v103 = vsel %vm102, %v101, 0.0
    %vm104 = vcmask 1046528
    %v105 = vsel %vm104, %v103, 0.0
    %106 = vst [vmem:[#allocation5] sm:$0xff] %v105
    // Predicated region
    $region10: #{tpu_custom_call.1} parent=1 // pred_check
      _
    $region11: #{tpu_custom_call.1} parent=1 // pred_check_branch
      %108 = sbr.rel (0) target = $region13
    $region12: #{tpu_custom_call.1} parent=1 // pred_region
      %s110 = ssub.s32 128, 128
      %111 = vsyncadd [#allocation4], %s110
      %s113 = sshll.u32 [#allocation5], 4
      %s114 = int_to_ptr.vmem [resolvable:$true] %s113
      %116 = dma.vmem_to_hbm [thread:$0]  %s114, 128, %s1, [#allocation4]
    $region13: #{tpu_custom_call.1} parent=1 // pred_fallthru
      _
    // Predicated region
    $region14: #{tpu_custom_call.1} parent=1 // pred_check
      _
    $region15: #{tpu_custom_call.1} parent=1 // pred_check_branch
      %118 = sbr.rel (0) target = $region17
    $region16: #{tpu_custom_call.1} parent=1 // pred_region
      %119 = dma.done [#allocation4], 128
    $region17: #{tpu_custom_call.1} parent=1 // pred_fallthru
      _
    %120 = vsyncpa [#allocation3], 1
    %121 = vsyncpa [#allocation4], 1

</llo_original>
